<compile_context>
chip_gen: v5e
topology: v5e:2x2
jax: 0.10.0
libtpu: 0.0.40
codegen_flags: <defaults>
</compile_context>

<pallas_src>
import functools

import jax
import jax.numpy as jnp
from jax.experimental import pallas as pl
from jax.experimental.pallas import tpu as pltpu


def _round_up(x, m):
    return (x + m - 1) // m * m


def _margin_loss_kernel(lengths_ref, targets_ref, out_ref, *,
                        m_pos, m_neg, lambda_, valid_b):
    # lengths_ref: (TB, C) input-dtype block in VMEM
    # targets_ref: (TB, 1) int32 block in VMEM
    # out_ref:     (1, 1)  float32 per-block partial sum in SMEM
    lengths = lengths_ref[...].astype(jnp.float32)   # cast in-register, not in HBM
    tgt = targets_ref[...]                           # (TB, 1) int32
    tb, c = lengths.shape

    class_ids = jax.lax.broadcasted_iota(jnp.int32, (tb, c), 1)
    pos = jnp.maximum(m_pos - lengths, 0.0)
    neg = jnp.maximum(lengths - m_neg, 0.0)
    # one-hot blend as a single select (equivalent to t*pos^2 + lambda*(1-t)*neg^2)
    losses = jnp.where(class_ids == tgt, pos * pos, lambda_ * (neg * neg))

    # zero-out rows that come from batch padding (keeps reduction exact)
    row_ids = (pl.program_id(0) * tb
               + jax.lax.broadcasted_iota(jnp.int32, (tb, 1), 0))
    losses = jnp.where(row_ids < valid_b, losses, 0.0)

    out_ref[0, 0] = jnp.sum(losses)


def margin_loss(lengths, targets, m_pos=0.9, m_neg=0.1, lambda_=0.5,
                size_average=True, block_b=1024):
    """Pallas TPU implementation of MarginLoss.forward.

    lengths: (B, C) float array (f32 or bf16), capsule lengths.
    targets: (B,)   integer class indices.
    """
    b, c = lengths.shape
    targets2d = targets.astype(jnp.int32).reshape(b, 1)

    # Batch tile: a multiple of 8 sublanes, capped by block_b, covering the
    # (padded) batch. block_b=1024 keeps 2 inputs x 2 buffers well under the
    # scoped VMEM limit on all of v5e/v6e/v7x for typical C.
    tb = min(_round_up(b, 8), _round_up(block_b, 8))
    b_pad = _round_up(b, tb)
    if b_pad != b:
        lengths = jnp.pad(lengths, ((0, b_pad - b), (0, 0)))
        # out-of-range class id -> never matches iota; rows are also masked in-kernel
        targets2d = jnp.pad(targets2d, ((0, b_pad - b), (0, 0)),
                            constant_values=c)
    num_blocks = b_pad // tb

    kernel = functools.partial(
        _margin_loss_kernel, m_pos=float(m_pos), m_neg=float(m_neg),
        lambda_=float(lambda_), valid_b=b)

    itemsize = jnp.dtype(lengths.dtype).itemsize
    cost = pl.CostEstimate(
        flops=6 * b * c,
        transcendentals=0,
        bytes_accessed=b_pad * c * itemsize + b_pad * 4 + num_blocks * 4)

    partials = pl.pallas_call(
        kernel,
        out_shape=jax.ShapeDtypeStruct((num_blocks, 1), jnp.float32),
        grid=(num_blocks,),
        in_specs=[
            pl.BlockSpec((tb, c), lambda i: (i, 0)),   # lengths tile (VMEM)
            pl.BlockSpec((tb, 1), lambda i: (i, 0)),   # targets tile (VMEM)
        ],
        out_specs=pl.BlockSpec((1, 1), lambda i: (i, 0),
                               memory_space=pltpu.MemorySpace.SMEM),
        compiler_params=pltpu.CompilerParams(
            dimension_semantics=("parallel",)),
        cost_estimate=cost,
    )(lengths, targets2d)

    loss_sum = jnp.sum(partials)
    if size_average:
        return loss_sum / jnp.float32(b * c)
    return loss_sum


def _reference(lengths, targets, m_pos, m_neg, lambda_, size_average=True):
    # plain-JAX reference mirroring the PyTorch code (compute in f32)
    lengths = lengths.astype(jnp.float32)
    b, c = lengths.shape
    t = jax.nn.one_hot(targets, c, dtype=jnp.float32)
    losses = (t * jnp.maximum(m_pos - lengths, 0.0) ** 2
              + lambda_ * (1.0 - t) * jnp.maximum(lengths - m_neg, 0.0) ** 2)
    return losses.mean() if size_average else losses.sum()


if __name__ == "__main__":
    M_POS, M_NEG, LAMBDA = 0.9, 0.1, 0.5

    key = jax.random.PRNGKey(0)
    k1, k2, k3, k4 = jax.random.split(key, 4)

    # Case 1: small f32 batch, mean reduction.
    B, C = 8, 16
    lengths = jax.random.uniform(k1, (B, C), dtype=jnp.float32)
    targets = jax.random.randint(k2, (B,), 0, C, dtype=jnp.int32)
    out = jax.block_until_ready(
        margin_loss(lengths, targets, M_POS, M_NEG, LAMBDA, size_average=True))
    ref = _reference(lengths, targets, M_POS, M_NEG, LAMBDA, size_average=True)
    assert jnp.allclose(out, ref, rtol=1e-5, atol=1e-6), (out, ref)

    # Case 2: batch not a multiple of the sublane tile (exercises padding+mask),
    # bf16 input (no wrapper up-cast), sum reduction, small block to force a grid.
    B2, C2 = 13, 10
    lengths2 = jax.random.uniform(k3, (B2, C2), dtype=jnp.float32).astype(jnp.bfloat16)
    targets2 = jax.random.randint(k4, (B2,), 0, C2, dtype=jnp.int32)
    out2 = jax.block_until_ready(
        margin_loss(lengths2, targets2, M_POS, M_NEG, LAMBDA,
                    size_average=False, block_b=8))
    ref2 = _reference(lengths2, targets2, M_POS, M_NEG, LAMBDA, size_average=False)
    assert jnp.allclose(out2, ref2, rtol=1e-5, atol=1e-5), (out2, ref2)

    print("KERNEL_OK")
</pallas_src>

<mosaic_0001>
module attributes {stable_mosaic.version = 11 : i64} {
  func.func @_margin_loss_kernel(%arg0: i32, %arg1: memref<8x16xf32, #tpu.memory_space<vmem>>, %arg2: memref<8x1xi32, #tpu.memory_space<vmem>>, %arg3: memref<1x1xf32, #tpu.memory_space<smem>>) attributes {dimension_semantics = [#tpu.dimension_semantics<parallel>], iteration_bounds = array<i64: 1>, scalar_prefetch = 0 : i64, scratch_operands = 0 : i64, tpu.core_type = #tpu.core_type<tc>, window_params = [{transform_indices = @transform_0, window_bounds = array<i64: 8, 16>}, {transform_indices = @transform_1, window_bounds = array<i64: 8, 1>}, {transform_indices = @transform_2, window_bounds = array<i64: 1, 1>}]} {
    %c0 = arith.constant 0 : index
    %c0_0 = arith.constant 0 : index
    %0 = vector.load %arg1[%c0, %c0_0] : memref<8x16xf32, #tpu.memory_space<vmem>>, vector<8x16xf32>
    %c0_1 = arith.constant 0 : index
    %c0_2 = arith.constant 0 : index
    %1 = vector.load %arg2[%c0_1, %c0_2] : memref<8x1xi32, #tpu.memory_space<vmem>>, vector<8x1xi32>
    %2 = tpu.iota {dimensions = array<i32: 1>} : vector<8x16xi32>
    %cst = arith.constant 0.899999976 : f32
    %3 = vector.broadcast %cst : f32 to vector<8x16xf32>
    %4 = arith.subf %3, %0 : vector<8x16xf32>
    %cst_3 = arith.constant 0.000000e+00 : f32
    %5 = vector.broadcast %cst_3 : f32 to vector<8x16xf32>
    %6 = arith.maximumf %4, %5 : vector<8x16xf32>
    %cst_4 = arith.constant 1.000000e-01 : f32
    %7 = vector.broadcast %cst_4 : f32 to vector<8x16xf32>
    %8 = arith.subf %0, %7 : vector<8x16xf32>
    %cst_5 = arith.constant 0.000000e+00 : f32
    %9 = vector.broadcast %cst_5 : f32 to vector<8x16xf32>
    %10 = arith.maximumf %8, %9 : vector<8x16xf32>
    %11 = vector.broadcast %1 : vector<8x1xi32> to vector<8x16xi32>
    %12 = arith.cmpi eq, %2, %11 : vector<8x16xi32>
    %13 = arith.mulf %6, %6 : vector<8x16xf32>
    %14 = arith.mulf %10, %10 : vector<8x16xf32>
    %cst_6 = arith.constant 5.000000e-01 : f32
    %15 = vector.broadcast %cst_6 : f32 to vector<8x16xf32>
    %16 = arith.mulf %15, %14 : vector<8x16xf32>
    %17 = arith.select %12, %13, %16 : vector<8x16xi1>, vector<8x16xf32>
    %c8_i32 = arith.constant 8 : i32
    %18 = arith.muli %arg0, %c8_i32 : i32
    %19 = tpu.iota {dimensions = array<i32: 0>} : vector<8x1xi32>
    %20 = vector.broadcast %18 : i32 to vector<8x1xi32>
    %21 = arith.addi %20, %19 : vector<8x1xi32>
    %c8_i32_7 = arith.constant 8 : i32
    %22 = vector.broadcast %c8_i32_7 : i32 to vector<8x1xi32>
    %23 = arith.cmpi slt, %21, %22 : vector<8x1xi32>
    %cst_8 = arith.constant 0.000000e+00 : f32
    %24 = vector.shape_cast %23 : vector<8x1xi1> to vector<8x1xi1>
    %25 = vector.broadcast %24 : vector<8x1xi1> to vector<8x16xi1>
    %26 = vector.broadcast %cst_8 : f32 to vector<8x16xf32>
    %27 = arith.select %25, %17, %26 : vector<8x16xi1>, vector<8x16xf32>
    %28 = vector.shape_cast %27 : vector<8x16xf32> to vector<1x8x16xf32>
    %cst_9 = arith.constant dense<0.000000e+00> : vector<1xf32>
    %29 = vector.multi_reduction <add>, %28, %cst_9 [1, 2] : vector<1x8x16xf32> to vector<1xf32>
    %30 = vector.shape_cast %29 : vector<1xf32> to vector<1x1x1xf32>
    %31 = vector.extract %30[0, 0, 0] : f32 from vector<1x1x1xf32>
    %c0_10 = arith.constant 0 : index
    %c0_11 = arith.constant 0 : index
    %32 = memref.load %arg3[%c0_10, %c0_11] : memref<1x1xf32, #tpu.memory_space<smem>>
    memref.store %31, %arg3[%c0_10, %c0_11] : memref<1x1xf32, #tpu.memory_space<smem>>
    return
  }
  func.func @transform_0(%arg0: i32) -> (i32, i32) {
    %c0_i32 = arith.constant 0 : i32
    %c0_i32_0 = arith.constant 0 : i32
    return %arg0, %c0_i32 : i32, i32
  }
  func.func @transform_1(%arg0: i32) -> (i32, i32) {
    %c0_i32 = arith.constant 0 : i32
    %c0_i32_0 = arith.constant 0 : i32
    return %arg0, %c0_i32 : i32, i32
  }
  func.func @transform_2(%arg0: i32) -> (i32, i32) {
    %c0_i32 = arith.constant 0 : i32
    %c0_i32_0 = arith.constant 0 : i32
    return %arg0, %c0_i32 : i32, i32
  }
}

</mosaic_0001>

<llo_original>
// kernel: tpu_custom_call.1
$region0: #{tpu_custom_call.1}
  #allocation0 [shape = 'u32[]', space=smem, size = 0x4, offset = 0x4, fixed_abs, tag = 'smem constant byte address 0x4 - core index']
  #allocation1 [shape = 'u32[72,128]{1,0:T(1,128)}', space=vmem, size = 0x9000, scoped, tag = 'internal scratch']
  %s0 = inlined_call_operand.vmem [shape: f32[8,16], index: 0, kind: input, shape index: {}]
  %s1 = inlined_call_operand.vmem [shape: s32[8,1], index: 1, kind: input, shape index: {}]
  %s2 = inlined_call_operand.hbm [shape: f32[1,1], index: 2, kind: output, shape index: {}]
  %s3 = sld [smem:[#allocation0]]
  $region18: #{tpu_custom_call.1} parent=0
    _
  %s5 = ssub.s32 1, %s3
  %s6 = scalar_select 0, %s5, %s3
  $region1: #{tpu_custom_call.1} parent=0
    #allocation2 [shape = 'u8[512]{0}', space=smem, size = 0x200, scoped, tag = 'output window, operand 0, single buffered']
    #allocation3 [shape = 's32[1]{0}', space=sflag, size = 0x4, scoped, tag = 'scoped memory for tpu_custom_call.1']
    %7 = vsyncpa [#allocation3], 0
    // Predicated region
    $region2: #{tpu_custom_call.1} parent=1 // pred_check
      _
    $region3: #{tpu_custom_call.1} parent=1 // pred_check_branch
      %9 = sbr.rel (0) target = $region5
    $region4: #{tpu_custom_call.1} parent=1 // pred_region
      _
    $region5: #{tpu_custom_call.1} parent=1 // pred_fallthru
      _
    // Predicated region
    $region6: #{tpu_custom_call.1} parent=1 // pred_check
      _
    $region7: #{tpu_custom_call.1} parent=1 // pred_check_branch
      %11 = sbr.rel (0) target = $region9
    $region8: #{tpu_custom_call.1} parent=1 // pred_region
      _
    $region9: #{tpu_custom_call.1} parent=1 // pred_fallthru
      _
    %v12 = vld [vmem:[%s0] sm:$0xff]
    %v13 = vld [vmem:[%s1] sm:$0xff]
    %v14 = vlaneseq
    %v15 = vand.u32 %v14, 127
    %v16 = vsub.f32 0.9, %v12
    %v17 = vmax.f32 %v16, 0.0
    %v18 = vsub.f32 %v12, 0.1
    %v19 = vmax.f32 %v18, 0.0
    %20 = vset.pattern.permute.xlu0 0
    %21 = vperm.xlu0 %20, %v13
    %v22 = vpop.permute.xlu0 %21
    %vm23 = vcmp.eq.s32.totalorder %v15, %v22
    %v24 = vmul.f32 %v17, %v17
    %v25 = vmul.f32 %v19, %v19
    %v26 = vmul.f32 %v25, 0.5
    %v27 = vsel %vm23, %v24, %v26
    %s28 = smul.u32 0, 8
    %v29 = vlaneseq
    %v30 = vshrl.u32 %v29, 7
    %v31 = vstv %s28
    %v32 = vadd.s32 %v31, %v30
    %vm33 = vcmp.lt.s32.totalorder %v32, 8
    %v34 = vsel %vm33, 1, 0
    %vm35 = vcmp.eq.s32.totalorder %v34, 1
    %v36 = vsel %vm35, %v27, 0.0
    %vm37 = vcmask 130048
    %v38 = vsel %vm37, %v36, 0.0
    %39 = vadd.xlane.f32.xlu0 %v38
    %v40 = vpop.xlane.xlu0 %39
    %v41 = vrot.slane %v40, 4
    %v42 = vadd.f32 %v40, %v41
    %v43 = vrot.slane %v42, 2
    %v44 = vadd.f32 %v42, %v43
    %v45 = vrot.slane %v44, 1
    %v46 = vadd.f32 %v44, %v45
    %s47 = vtos %v46
    %s48 = scalar_lea.smem [#allocation2], 0
    %49 = sst [smem:[%s48]] %s47
    // Predicated region
    $region10: #{tpu_custom_call.1} parent=1 // pred_check
      _
    $region11: #{tpu_custom_call.1} parent=1 // pred_check_branch
      %51 = sbr.rel (0) target = $region13
    $region12: #{tpu_custom_call.1} parent=1 // pred_region
      %53 = vsyncadd [#allocation3], 0
      %s55 = sshll.u32 %s2, 4
      %s56 = int_to_ptr.hbm [resolvable:$true] %s55
      %58 = dma.smem_to_hbm [#allocation2], 16, %s56, [#allocation3]
    $region13: #{tpu_custom_call.1} parent=1 // pred_fallthru
      _
    // Predicated region
    $region14: #{tpu_custom_call.1} parent=1 // pred_check
      _
    $region15: #{tpu_custom_call.1} parent=1 // pred_check_branch
      %60 = sbr.rel (0) target = $region17
    $region16: #{tpu_custom_call.1} parent=1 // pred_region
      %62 = dma.done [#allocation3], 16
    $region17: #{tpu_custom_call.1} parent=1 // pred_fallthru
      _
    %63 = sfence
    %64 = vsyncpa [#allocation3], 1

</llo_original>
